<compile_context>
chip_gen: v7x
topology: tpu7x:2x2x1
jax: 0.10.0
libtpu: 0.0.40
codegen_flags: <defaults>
</compile_context>

<pallas_src>
import functools

import jax
import jax.numpy as jnp
from jax.experimental import pallas as pl
from jax.experimental.pallas import tpu as pltpu

IN_DIM = 64 * 10      # 640
HID = 128
OUT_DIM = 3
OUT_PAD = 128         # lane-dense padded logits width
DROP_P = 0.5
TILE_B_MAX = 1024     # ~7 MiB double-buffered VMEM footprint; safe on v5e/v6e/v7x


# ---------------------------------------------------------------------------
# In-kernel Bernoulli(0.5) mask from an integer hash (no pltpu PRNG needed).
# ---------------------------------------------------------------------------
def _wrap_i32(v):
    """Map a u32 constant to its two's-complement int32 Python int."""
    v &= 0xFFFFFFFF
    return v - 0x100000000 if v >= 0x80000000 else v


_C1 = _wrap_i32(0x9E3779B9)
_C2 = _wrap_i32(0x85EBCA6B)
_C3 = _wrap_i32(0xC2B2AE35)
_M1 = _wrap_i32(0x85EBCA6B)
_M2 = _wrap_i32(0xC2B2AE35)


def _lsr32(x, n):
    """Logical shift-right for int32 (arith shift then mask sign-extension)."""
    return (x >> n) & jnp.int32((1 << (32 - n)) - 1)


def _keep_mask(seed, row0, shape):
    """Bernoulli(0.5) keep-mask hashed from (seed, global_row, col).

    Pure int32 VPU ops -> lowers in Mosaic and in interpret mode.  row0 mixes
    the tile's global row offset so each batch tile draws a distinct mask.
    """
    r = jax.lax.broadcasted_iota(jnp.int32, shape, 0) + row0
    c = jax.lax.broadcasted_iota(jnp.int32, shape, 1)
    k = seed * jnp.int32(_C1) + r * jnp.int32(_C2) + c * jnp.int32(_C3)
    # murmur3-style finalizer
    k = k ^ _lsr32(k, 16)
    k = k * jnp.int32(_M1)
    k = k ^ _lsr32(k, 13)
    k = k * jnp.int32(_M2)
    k = k ^ _lsr32(k, 16)
    return k >= 0          # sign bit clear  <=>  keep  (p = 0.5)


# ---------------------------------------------------------------------------
# Kernel
# ---------------------------------------------------------------------------
def classifier_kernel(seed_ref,                 # SMEM scalar prefetch: (1,) int32
                      x_ref,                    # (TILE_B, 640)  streamed
                      w1_ref, b1_ref,           # (640,128), (1,128)   resident
                      w2s_ref, b2_ref,          # (128,128) pre-scaled by 1/(1-p)
                      w3p_ref, b3p_ref,         # zero-padded to (128,128),(1,128)
                      o_ref):                   # (TILE_B, 128) padded logits
    x = x_ref[...]

    # fc1 + relu  (f32 accumulation on the MXU)
    h = jnp.dot(x, w1_ref[...], preferred_element_type=jnp.float32) + b1_ref[...]
    h = jnp.maximum(h, 0.0)

    # dropout(p=0.5, training=True): zero half the activations.  The 1/(1-p)
    # rescale is folded into w2 at parameter-prep time, so only a select here.
    row0 = pl.program_id(0) * h.shape[0]
    keep = _keep_mask(seed_ref[0], row0, h.shape)
    h = jnp.where(keep, h, 0.0)

    # fc2 + relu
    h = jnp.dot(h, w2s_ref[...], preferred_element_type=jnp.float32) + b2_ref[...]
    h = jnp.maximum(h, 0.0)

    # fc3 -> lane-dense padded logits (real logits in [:, :OUT_DIM])
    o_ref[...] = (jnp.dot(h, w3p_ref[...], preferred_element_type=jnp.float32)
                  + b3p_ref[...]).astype(o_ref.dtype)


# ---------------------------------------------------------------------------
# Wrapper
# ---------------------------------------------------------------------------
def _round_up(n, m):
    return ((n + m - 1) // m) * m


@functools.partial(jax.jit, static_argnames=("tile_b",))
def _classifier_pallas(seed_arr, x_pad, w1, b1, w2s, b2, w3p, b3p, *, tile_b):
    bpad = x_pad.shape[0]
    num_tiles = bpad // tile_b
    grid_spec = pltpu.PrefetchScalarGridSpec(
        num_scalar_prefetch=1,
        grid=(num_tiles,),
        in_specs=[
            pl.BlockSpec((tile_b, IN_DIM), lambda i, s: (i, 0)),   # x (streamed)
            pl.BlockSpec((IN_DIM, HID),    lambda i, s: (0, 0)),   # w1
            pl.BlockSpec((1, HID),         lambda i, s: (0, 0)),   # b1
            pl.BlockSpec((HID, HID),       lambda i, s: (0, 0)),   # w2 (pre-scaled)
            pl.BlockSpec((1, HID),         lambda i, s: (0, 0)),   # b2
            pl.BlockSpec((HID, OUT_PAD),   lambda i, s: (0, 0)),   # w3 (padded)
            pl.BlockSpec((1, OUT_PAD),     lambda i, s: (0, 0)),   # b3 (padded)
        ],
        out_specs=pl.BlockSpec((tile_b, OUT_PAD), lambda i, s: (i, 0)),
    )
    return pl.pallas_call(
        classifier_kernel,
        out_shape=jax.ShapeDtypeStruct((bpad, OUT_PAD), jnp.float32),
        grid_spec=grid_spec,
        compiler_params=pltpu.CompilerParams(
            dimension_semantics=("parallel",)),   # megacore shard on v7x
    )(seed_arr, x_pad, w1, b1, w2s, b2, w3p, b3p)


def classifier_forward(x, params, seed, tile_b=TILE_B_MAX):
    """x: (B, 640) f32, params: output of prepare_params -> logits (B, 3) f32."""
    b = x.shape[0]
    tile_b = min(tile_b, _round_up(b, 8))
    bpad = _round_up(b, tile_b)
    if bpad != b:
        x = jnp.pad(x, ((0, bpad - b), (0, 0)))
    seed_arr = jnp.asarray([seed], dtype=jnp.int32)
    out = _classifier_pallas(seed_arr, x,
                             params["w1"], params["b1"],
                             params["w2"], params["b2"],
                             params["w3"], params["b3"],
                             tile_b=tile_b)
    return out[:b, :OUT_DIM]


# ---------------------------------------------------------------------------
# Parameters
# ---------------------------------------------------------------------------
def init_params(key):
    """Deterministic init mimicking nn.Linear's U(-1/sqrt(fan_in), +), (in,out) layout."""
    def linear(key, fan_in, fan_out):
        kw, kb = jax.random.split(key)
        bound = 1.0 / jnp.sqrt(fan_in)
        w = jax.random.uniform(kw, (fan_in, fan_out), jnp.float32, -bound, bound)
        b = jax.random.uniform(kb, (1, fan_out), jnp.float32, -bound, bound)
        return w, b

    k1, k2, k3 = jax.random.split(key, 3)
    w1, b1 = linear(k1, IN_DIM, HID)
    w2, b2 = linear(k2, HID, HID)
    w3, b3 = linear(k3, HID, OUT_DIM)
    return {"w1": w1, "b1": b1, "w2": w2, "b2": b2, "w3": w3, "b3": b3}


def prepare_params(raw):
    """One-time kernel-side prep: fold dropout 1/(1-p) into w2; pad fc3 to 128 lanes."""
    w3p = jnp.zeros((HID, OUT_PAD), jnp.float32).at[:, :OUT_DIM].set(raw["w3"])
    b3p = jnp.zeros((1, OUT_PAD), jnp.float32).at[:, :OUT_DIM].set(raw["b3"])
    return {"w1": raw["w1"], "b1": raw["b1"],
            "w2": raw["w2"] * (1.0 / (1.0 - DROP_P)), "b2": raw["b2"],
            "w3": w3p, "b3": b3p}


def _reference_forward(x, prepared, seed):
    """Pure-JAX reference with the identical dropout mask (single-tile case)."""
    h = jnp.maximum(x @ prepared["w1"] + prepared["b1"], 0.0)
    keep = _keep_mask(jnp.int32(seed), jnp.int32(0), h.shape)
    h = jnp.where(keep, h, 0.0)
    h = jnp.maximum(h @ prepared["w2"] + prepared["b2"], 0.0)
    return (h @ prepared["w3"] + prepared["b3"])[:, :OUT_DIM]


if __name__ == "__main__":
    key = jax.random.PRNGKey(0)
    kp, kx = jax.random.split(key)
    params = prepare_params(init_params(kp))

    B = 8
    x = jax.random.normal(kx, (B, IN_DIM), dtype=jnp.float32)

    out = classifier_forward(x, params, seed=0)
    out = jax.block_until_ready(out)
    assert out.shape == (B, OUT_DIM), out.shape
    assert bool(jnp.all(jnp.isfinite(out)))

    ref = _reference_forward(x, params, seed=0)
    assert bool(jnp.allclose(out, ref, rtol=5e-2, atol=5e-2)), \
        float(jnp.max(jnp.abs(out - ref)))

    print("KERNEL_OK")
</pallas_src>

<mosaic_0001>
module attributes {stable_mosaic.version = 11 : i64} {
  func.func @classifier_kernel(%arg0: i32, %arg1: memref<1xi32, #tpu.memory_space<smem>>, %arg2: memref<8x640xf32, #tpu.memory_space<vmem>>, %arg3: memref<640x128xf32, #tpu.memory_space<vmem>>, %arg4: memref<1x128xf32, #tpu.memory_space<vmem>>, %arg5: memref<128x128xf32, #tpu.memory_space<vmem>>, %arg6: memref<1x128xf32, #tpu.memory_space<vmem>>, %arg7: memref<128x128xf32, #tpu.memory_space<vmem>>, %arg8: memref<1x128xf32, #tpu.memory_space<vmem>>, %arg9: memref<8x128xf32, #tpu.memory_space<vmem>>) attributes {dimension_semantics = [#tpu.dimension_semantics<parallel>], iteration_bounds = array<i64: 1>, scalar_prefetch = 1 : i64, scratch_operands = 0 : i64, tpu.core_type = #tpu.core_type<tc>, window_params = [{transform_indices = @transform_0, window_bounds = array<i64: 8, 640>}, {pipeline_mode = #tpu.pipeline_mode<synchronous>, transform_indices = @transform_1, window_bounds = array<i64: 640, 128>}, {pipeline_mode = #tpu.pipeline_mode<synchronous>, transform_indices = @transform_2, window_bounds = array<i64: 1, 128>}, {pipeline_mode = #tpu.pipeline_mode<synchronous>, transform_indices = @transform_3, window_bounds = array<i64: 128, 128>}, {pipeline_mode = #tpu.pipeline_mode<synchronous>, transform_indices = @transform_4, window_bounds = array<i64: 1, 128>}, {pipeline_mode = #tpu.pipeline_mode<synchronous>, transform_indices = @transform_5, window_bounds = array<i64: 128, 128>}, {pipeline_mode = #tpu.pipeline_mode<synchronous>, transform_indices = @transform_6, window_bounds = array<i64: 1, 128>}, {transform_indices = @transform_7, window_bounds = array<i64: 8, 128>}]} {
    %c0 = arith.constant 0 : index
    %c0_0 = arith.constant 0 : index
    %0 = vector.load %arg2[%c0, %c0_0] : memref<8x640xf32, #tpu.memory_space<vmem>>, vector<8x640xf32>
    %c0_1 = arith.constant 0 : index
    %c0_2 = arith.constant 0 : index
    %1 = vector.load %arg3[%c0_1, %c0_2] : memref<640x128xf32, #tpu.memory_space<vmem>>, vector<640x128xf32>
    %cst = arith.constant dense<0.000000e+00> : vector<8x128xf32>
    %2 = tpu.matmul %0, %1, %cst {dimension_numbers = #tpu.dot_dimension_numbers<[1], [0], [0], [1], [0, 0, 1, 1], [], []>} : vector<8x640xf32>, vector<640x128xf32>, vector<8x128xf32> -> vector<8x128xf32>
    %c0_3 = arith.constant 0 : index
    %c0_4 = arith.constant 0 : index
    %3 = vector.load %arg4[%c0_3, %c0_4] : memref<1x128xf32, #tpu.memory_space<vmem>>, vector<1x128xf32>
    %4 = vector.broadcast %3 : vector<1x128xf32> to vector<8x128xf32>
    %5 = arith.addf %2, %4 : vector<8x128xf32>
    %cst_5 = arith.constant 0.000000e+00 : f32
    %6 = vector.broadcast %cst_5 : f32 to vector<8x128xf32>
    %7 = arith.maximumf %5, %6 : vector<8x128xf32>
    %c8_i32 = arith.constant 8 : i32
    %8 = arith.muli %arg0, %c8_i32 : i32
    %c0_6 = arith.constant 0 : index
    %9 = memref.load %arg1[%c0_6] : memref<1xi32, #tpu.memory_space<smem>>
    %10 = tpu.iota {dimensions = array<i32: 0>} : vector<8x128xi32>
    %11 = vector.broadcast %8 : i32 to vector<8x128xi32>
    %12 = arith.addi %10, %11 : vector<8x128xi32>
    %13 = tpu.iota {dimensions = array<i32: 1>} : vector<8x128xi32>
    %c-1640531527_i32 = arith.constant -1640531527 : i32
    %14 = arith.muli %9, %c-1640531527_i32 : i32
    %c-2048144789_i32 = arith.constant -2048144789 : i32
    %15 = vector.broadcast %c-2048144789_i32 : i32 to vector<8x128xi32>
    %16 = arith.muli %12, %15 : vector<8x128xi32>
    %17 = vector.broadcast %14 : i32 to vector<8x128xi32>
    %18 = arith.addi %17, %16 : vector<8x128xi32>
    %c-1028477387_i32 = arith.constant -1028477387 : i32
    %19 = vector.broadcast %c-1028477387_i32 : i32 to vector<8x128xi32>
    %20 = arith.muli %13, %19 : vector<8x128xi32>
    %21 = arith.addi %18, %20 : vector<8x128xi32>
    %c16_i32 = arith.constant 16 : i32
    %22 = vector.broadcast %c16_i32 : i32 to vector<8x128xi32>
    %23 = arith.shrsi %21, %22 : vector<8x128xi32>
    %c65535_i32 = arith.constant 65535 : i32
    %24 = vector.broadcast %c65535_i32 : i32 to vector<8x128xi32>
    %25 = arith.andi %23, %24 : vector<8x128xi32>
    %26 = arith.xori %21, %25 : vector<8x128xi32>
    %c-2048144789_i32_7 = arith.constant -2048144789 : i32
    %27 = vector.broadcast %c-2048144789_i32_7 : i32 to vector<8x128xi32>
    %28 = arith.muli %26, %27 : vector<8x128xi32>
    %c13_i32 = arith.constant 13 : i32
    %29 = vector.broadcast %c13_i32 : i32 to vector<8x128xi32>
    %30 = arith.shrsi %28, %29 : vector<8x128xi32>
    %c524287_i32 = arith.constant 524287 : i32
    %31 = vector.broadcast %c524287_i32 : i32 to vector<8x128xi32>
    %32 = arith.andi %30, %31 : vector<8x128xi32>
    %33 = arith.xori %28, %32 : vector<8x128xi32>
    %c-1028477387_i32_8 = arith.constant -1028477387 : i32
    %34 = vector.broadcast %c-1028477387_i32_8 : i32 to vector<8x128xi32>
    %35 = arith.muli %33, %34 : vector<8x128xi32>
    %c16_i32_9 = arith.constant 16 : i32
    %36 = vector.broadcast %c16_i32_9 : i32 to vector<8x128xi32>
    %37 = arith.shrsi %35, %36 : vector<8x128xi32>
    %c65535_i32_10 = arith.constant 65535 : i32
    %38 = vector.broadcast %c65535_i32_10 : i32 to vector<8x128xi32>
    %39 = arith.andi %37, %38 : vector<8x128xi32>
    %40 = arith.xori %35, %39 : vector<8x128xi32>
    %c0_i32 = arith.constant 0 : i32
    %41 = vector.broadcast %c0_i32 : i32 to vector<8x128xi32>
    %42 = arith.cmpi sge, %40, %41 : vector<8x128xi32>
    %cst_11 = arith.constant 0.000000e+00 : f32
    %43 = vector.broadcast %cst_11 : f32 to vector<8x128xf32>
    %44 = arith.select %42, %7, %43 : vector<8x128xi1>, vector<8x128xf32>
    %c0_12 = arith.constant 0 : index
    %c0_13 = arith.constant 0 : index
    %45 = vector.load %arg5[%c0_12, %c0_13] : memref<128x128xf32, #tpu.memory_space<vmem>>, vector<128x128xf32>
    %cst_14 = arith.constant dense<0.000000e+00> : vector<8x128xf32>
    %46 = tpu.matmul %44, %45, %cst_14 {dimension_numbers = #tpu.dot_dimension_numbers<[1], [0], [0], [1], [0, 0, 1, 1], [], []>} : vector<8x128xf32>, vector<128x128xf32>, vector<8x128xf32> -> vector<8x128xf32>
    %c0_15 = arith.constant 0 : index
    %c0_16 = arith.constant 0 : index
    %47 = vector.load %arg6[%c0_15, %c0_16] : memref<1x128xf32, #tpu.memory_space<vmem>>, vector<1x128xf32>
    %48 = vector.broadcast %47 : vector<1x128xf32> to vector<8x128xf32>
    %49 = arith.addf %46, %48 : vector<8x128xf32>
    %cst_17 = arith.constant 0.000000e+00 : f32
    %50 = vector.broadcast %cst_17 : f32 to vector<8x128xf32>
    %51 = arith.maximumf %49, %50 : vector<8x128xf32>
    %c0_18 = arith.constant 0 : index
    %c0_19 = arith.constant 0 : index
    %52 = vector.load %arg7[%c0_18, %c0_19] : memref<128x128xf32, #tpu.memory_space<vmem>>, vector<128x128xf32>
    %cst_20 = arith.constant dense<0.000000e+00> : vector<8x128xf32>
    %53 = tpu.matmul %51, %52, %cst_20 {dimension_numbers = #tpu.dot_dimension_numbers<[1], [0], [0], [1], [0, 0, 1, 1], [], []>} : vector<8x128xf32>, vector<128x128xf32>, vector<8x128xf32> -> vector<8x128xf32>
    %c0_21 = arith.constant 0 : index
    %c0_22 = arith.constant 0 : index
    %54 = vector.load %arg8[%c0_21, %c0_22] : memref<1x128xf32, #tpu.memory_space<vmem>>, vector<1x128xf32>
    %55 = vector.broadcast %54 : vector<1x128xf32> to vector<8x128xf32>
    %56 = arith.addf %53, %55 : vector<8x128xf32>
    %c0_23 = arith.constant 0 : index
    %c0_24 = arith.constant 0 : index
    %57 = vector.load %arg9[%c0_23, %c0_24] : memref<8x128xf32, #tpu.memory_space<vmem>>, vector<8x128xf32>
    tpu.vector_store %arg9[%c0_23, %c0_24], %56 {strides = array<i32>} : memref<8x128xf32, #tpu.memory_space<vmem>>, vector<8x128xf32>,
    return
  }
  func.func @transform_0(%arg0: i32, %arg1: memref<1xi32, #tpu.memory_space<smem>>) -> (i32, i32) {
    %c0_i32 = arith.constant 0 : i32
    %c0_i32_0 = arith.constant 0 : i32
    return %arg0, %c0_i32 : i32, i32
  }
  func.func @transform_1(%arg0: i32, %arg1: memref<1xi32, #tpu.memory_space<smem>>) -> (i32, i32) {
    %c0_i32 = arith.constant 0 : i32
    %c0_i32_0 = arith.constant 0 : i32
    %c0_i32_1 = arith.constant 0 : i32
    return %c0_i32, %c0_i32_0 : i32, i32
  }
  func.func @transform_2(%arg0: i32, %arg1: memref<1xi32, #tpu.memory_space<smem>>) -> (i32, i32) {
    %c0_i32 = arith.constant 0 : i32
    %c0_i32_0 = arith.constant 0 : i32
    %c0_i32_1 = arith.constant 0 : i32
    return %c0_i32, %c0_i32_0 : i32, i32
  }
  func.func @transform_3(%arg0: i32, %arg1: memref<1xi32, #tpu.memory_space<smem>>) -> (i32, i32) {
    %c0_i32 = arith.constant 0 : i32
    %c0_i32_0 = arith.constant 0 : i32
    %c0_i32_1 = arith.constant 0 : i32
    return %c0_i32, %c0_i32_0 : i32, i32
  }
  func.func @transform_4(%arg0: i32, %arg1: memref<1xi32, #tpu.memory_space<smem>>) -> (i32, i32) {
    %c0_i32 = arith.constant 0 : i32
    %c0_i32_0 = arith.constant 0 : i32
    %c0_i32_1 = arith.constant 0 : i32
    return %c0_i32, %c0_i32_0 : i32, i32
  }
  func.func @transform_5(%arg0: i32, %arg1: memref<1xi32, #tpu.memory_space<smem>>) -> (i32, i32) {
    %c0_i32 = arith.constant 0 : i32
    %c0_i32_0 = arith.constant 0 : i32
    %c0_i32_1 = arith.constant 0 : i32
    return %c0_i32, %c0_i32_0 : i32, i32
  }
  func.func @transform_6(%arg0: i32, %arg1: memref<1xi32, #tpu.memory_space<smem>>) -> (i32, i32) {
    %c0_i32 = arith.constant 0 : i32
    %c0_i32_0 = arith.constant 0 : i32
    %c0_i32_1 = arith.constant 0 : i32
    return %c0_i32, %c0_i32_0 : i32, i32
  }
  func.func @transform_7(%arg0: i32, %arg1: memref<1xi32, #tpu.memory_space<smem>>) -> (i32, i32) {
    %c0_i32 = arith.constant 0 : i32
    %c0_i32_0 = arith.constant 0 : i32
    return %arg0, %c0_i32 : i32, i32
  }
}

</mosaic_0001>

<llo_original>
// kernel: _classifier_pallas.1
$region0: #{_classifier_pallas.1}
  #allocation0 [shape = 'u32[]', space=smem, size = 0x4, offset = 0x4, fixed_abs, tag = 'smem constant byte address 0x4 - core index']
  #allocation1 [shape = 'u32[144,128]{1,0:T(1,128)}', space=vmem, size = 0x12000, scoped, tag = 'internal scratch']
  #allocation2 [shape = 's32[1]{0}', space=sflag, size = 0x4, scoped, tag = 'scoped memory for _classifier_pallas.1']
  #allocation3 [shape = 's32[1]{0:T(128)S(6)}', space=smem, size = 0x200, scoped, tag = 'prefetched SMEM operand 0']
  %s0 = inlined_call_operand.<no memory space> [shape: s32[1], index: 0, kind: input, shape index: {}]
  %s1 = inlined_call_operand.hbm [shape: f32[8,640], index: 1, kind: input, shape index: {}]
  %s2 = inlined_call_operand.hbm [shape: f32[640,128], index: 2, kind: input, shape index: {}]
  %s3 = inlined_call_operand.vmem [shape: f32[1,128], index: 3, kind: input, shape index: {}]
  %s4 = inlined_call_operand.hbm [shape: f32[128,128], index: 4, kind: input, shape index: {}]
  %s5 = inlined_call_operand.vmem [shape: f32[1,128], index: 5, kind: input, shape index: {}]
  %s6 = inlined_call_operand.hbm [shape: f32[128,128], index: 6, kind: input, shape index: {}]
  %s7 = inlined_call_operand.vmem [shape: f32[1,128], index: 7, kind: input, shape index: {}]
  %s8 = inlined_call_operand.hbm [shape: f32[8,128], index: 8, kind: output, shape index: {}]
  %s9 = sld [smem:[#allocation0]]
  $region54: #{_classifier_pallas.1} parent=0
    _
  %s11 = ssub.s32 1, %s9
  %s12 = scalar_select 0, %s11, %s9
  %13 = sst [smem:[#allocation3]] %s0
  $region1: #{_classifier_pallas.1} parent=0
    #allocation4 [shape = 'u8[20480]{0}', space=vmem, size = 0x5000, scoped, tag = 'input window, operand 1, single buffered']
    #allocation5 [shape = 's32[1]{0}', space=sflag, size = 0x4, scoped, tag = 'scoped memory for _classifier_pallas.1']
    #allocation6 [shape = 's32[1]{0}', space=sflag, size = 0x4, scoped, tag = 'scoped memory for _classifier_pallas.1']
    #allocation7 [shape = 'u8[327680]{0}', space=vmem, size = 0x50000, scoped, tag = 'input window, operand 2, single buffered']
    #allocation8 [shape = 's32[1]{0}', space=sflag, size = 0x4, scoped, tag = 'scoped memory for _classifier_pallas.1']
    #allocation9 [shape = 'u8[65536]{0}', space=vmem, size = 0x10000, scoped, tag = 'input window, operand 4, single buffered']
    #allocation10 [shape = 'u8[65536]{0}', space=vmem, size = 0x10000, scoped, tag = 'input window, operand 6, single buffered']
    #allocation11 [shape = 's32[1]{0}', space=sflag, size = 0x4, scoped, tag = 'scoped memory for _classifier_pallas.1']
    #allocation12 [shape = 'u8[4096]{0}', space=vmem, size = 0x1000, scoped, tag = 'output window, operand 0, single buffered']
    %14 = vsyncpa [#allocation5], 0
    %15 = vsyncpa [#allocation8], 0
    %16 = vsyncpa [#allocation11], 0
    %17 = vsyncpa [#allocation6], 0
    // Predicated region
    $region2: #{_classifier_pallas.1} parent=1 // pred_check
      _
    $region3: #{_classifier_pallas.1} parent=1 // pred_check_branch
      %19 = sbr.rel (0) target = $region5
    $region4: #{_classifier_pallas.1} parent=1 // pred_region
      %s21 = ssub.s32 640, 640
      %22 = vsyncadd [#allocation5], %s21
      %s24 = sshll.u32 [#allocation4], 4
      %s25 = int_to_ptr.vmem [resolvable:$true] %s24
      %27 = dma.hbm_to_vmem [thread:$0]  %s1, 640, %s25, [#allocation5]
    $region5: #{_classifier_pallas.1} parent=1 // pred_fallthru
      _
    // Predicated region
    $region6: #{_classifier_pallas.1} parent=1 // pred_check
      _
    $region7: #{_classifier_pallas.1} parent=1 // pred_check_branch
      %29 = sbr.rel (0) target = $region9
    $region8: #{_classifier_pallas.1} parent=1 // pred_region
      %s31 = ssub.s32 10240, 10240
      %32 = vsyncadd [#allocation8], %s31
      %s33 = sshll.u32 [#allocation7], 4
      %s34 = int_to_ptr.vmem [resolvable:$true] %s33
      %39 = dma.hbm_to_vmem [thread:$0]  %s2, 10240, %s34, [#allocation8], 128, 128, 8
    $region9: #{_classifier_pallas.1} parent=1 // pred_fallthru
      _
    // Predicated region
    $region10: #{_classifier_pallas.1} parent=1 // pred_check
      _
    $region11: #{_classifier_pallas.1} parent=1 // pred_check_branch
      %41 = sbr.rel (0) target = $region13
    $region12: #{_classifier_pallas.1} parent=1 // pred_region
      _
    $region13: #{_classifier_pallas.1} parent=1 // pred_fallthru
      _
    // Predicated region
    $region14: #{_classifier_pallas.1} parent=1 // pred_check
      _
    $region15: #{_classifier_pallas.1} parent=1 // pred_check_branch
      %43 = sbr.rel (0) target = $region17
    $region16: #{_classifier_pallas.1} parent=1 // pred_region
      %s45 = ssub.s32 2048, 2048
      %46 = vsyncadd [#allocation8], %s45
      %s47 = sshll.u32 [#allocation9], 4
      %s48 = int_to_ptr.vmem [resolvable:$true] %s47
      %53 = dma.hbm_to_vmem [thread:$0]  %s4, 2048, %s48, [#allocation8], 128, 128, 8
    $region17: #{_classifier_pallas.1} parent=1 // pred_fallthru
      _
    // Predicated region
    $region18: #{_classifier_pallas.1} parent=1 // pred_check
      _
    $region19: #{_classifier_pallas.1} parent=1 // pred_check_branch
      %55 = sbr.rel (0) target = $region21
    $region20: #{_classifier_pallas.1} parent=1 // pred_region
      _
    $region21: #{_classifier_pallas.1} parent=1 // pred_fallthru
      _
    // Predicated region
    $region22: #{_classifier_pallas.1} parent=1 // pred_check
      _
    $region23: #{_classifier_pallas.1} parent=1 // pred_check_branch
      %57 = sbr.rel (0) target = $region25
    $region24: #{_classifier_pallas.1} parent=1 // pred_region
      %s59 = ssub.s32 2048, 2048
      %60 = vsyncadd [#allocation11], %s59
      %s61 = sshll.u32 [#allocation10], 4
      %s62 = int_to_ptr.vmem [resolvable:$true] %s61
      %67 = dma.hbm_to_vmem [thread:$0]  %s6, 2048, %s62, [#allocation11], 128, 128, 8
    $region25: #{_classifier_pallas.1} parent=1 // pred_fallthru
      _
    // Predicated region
    $region26: #{_classifier_pallas.1} parent=1 // pred_check
      _
    $region27: #{_classifier_pallas.1} parent=1 // pred_check_branch
      %69 = sbr.rel (0) target = $region29
    $region28: #{_classifier_pallas.1} parent=1 // pred_region
      _
    $region29: #{_classifier_pallas.1} parent=1 // pred_fallthru
      _
    // Predicated region
    $region30: #{_classifier_pallas.1} parent=1 // pred_check
      _
    $region31: #{_classifier_pallas.1} parent=1 // pred_check_branch
      %71 = sbr.rel (0) target = $region33
    $region32: #{_classifier_pallas.1} parent=1 // pred_region
      %72 = dma.done [#allocation5], 640
    $region33: #{_classifier_pallas.1} parent=1 // pred_fallthru
      _
    // Predicated region
    $region34: #{_classifier_pallas.1} parent=1 // pred_check
      _
    $region35: #{_classifier_pallas.1} parent=1 // pred_check_branch
      %74 = sbr.rel (0) target = $region37
    $region36: #{_classifier_pallas.1} parent=1 // pred_region
      %75 = dma.done [#allocation8], 10240
    $region37: #{_classifier_pallas.1} parent=1 // pred_fallthru
      _
    // Predicated region
    $region38: #{_classifier_pallas.1} parent=1 // pred_check
      _
    $region39: #{_classifier_pallas.1} parent=1 // pred_check_branch
      %77 = sbr.rel (0) target = $region41
    $region40: #{_classifier_pallas.1} parent=1 // pred_region
      %78 = dma.done [#allocation8], 2048
    $region41: #{_classifier_pallas.1} parent=1 // pred_fallthru
      _
    // Predicated region
    $region42: #{_classifier_pallas.1} parent=1 // pred_check
      _
    $region43: #{_classifier_pallas.1} parent=1 // pred_check_branch
      %80 = sbr.rel (0) target = $region45
    $region44: #{_classifier_pallas.1} parent=1 // pred_region
      %81 = dma.done [#allocation11], 2048
    $region45: #{_classifier_pallas.1} parent=1 // pred_fallthru
      _
    %v82 = vld [vmem:[#allocation4] sm:$0xff]
    %v83 = vld [vmem:[#allocation4 + $0x8] sm:$0xff]
    %v84 = vld [vmem:[#allocation4 + $0x10] sm:$0xff]
    %v85 = vld [vmem:[#allocation4 + $0x18] sm:$0xff]
    %v86 = vld [vmem:[#allocation4 + $0x20] sm:$0xff]
    %v87 = vld [vmem:[#allocation7] sm:$0xff]
    %v88 = vld [vmem:[#allocation7 + $0x8] sm:$0xff]
    %v89 = vld [vmem:[#allocation7 + $0x10] sm:$0xff]
    %v90 = vld [vmem:[#allocation7 + $0x18] sm:$0xff]
    %v91 = vld [vmem:[#allocation7 + $0x20] sm:$0xff]
    %v92 = vld [vmem:[#allocation7 + $0x28] sm:$0xff]
    %v93 = vld [vmem:[#allocation7 + $0x30] sm:$0xff]
    %v94 = vld [vmem:[#allocation7 + $0x38] sm:$0xff]
    %v95 = vld [vmem:[#allocation7 + $0x40] sm:$0xff]
    %v96 = vld [vmem:[#allocation7 + $0x48] sm:$0xff]
    %v97 = vld [vmem:[#allocation7 + $0x50] sm:$0xff]
    %v98 = vld [vmem:[#allocation7 + $0x58] sm:$0xff]
    %v99 = vld [vmem:[#allocation7 + $0x60] sm:$0xff]
    %v100 = vld [vmem:[#allocation7 + $0x68] sm:$0xff]
    %v101 = vld [vmem:[#allocation7 + $0x70] sm:$0xff]
    %v102 = vld [vmem:[#allocation7 + $0x78] sm:$0xff]
    %v103 = vld [vmem:[#allocation7 + $0x80] sm:$0xff]
    %v104 = vld [vmem:[#allocation7 + $0x88] sm:$0xff]
    %v105 = vld [vmem:[#allocation7 + $0x90] sm:$0xff]
    %v106 = vld [vmem:[#allocation7 + $0x98] sm:$0xff]
    %v107 = vld [vmem:[#allocation7 + $0xa0] sm:$0xff]
    %v108 = vld [vmem:[#allocation7 + $0xa8] sm:$0xff]
    %v109 = vld [vmem:[#allocation7 + $0xb0] sm:$0xff]
    %v110 = vld [vmem:[#allocation7 + $0xb8] sm:$0xff]
    %v111 = vld [vmem:[#allocation7 + $0xc0] sm:$0xff]
    %v112 = vld [vmem:[#allocation7 + $0xc8] sm:$0xff]
    %v113 = vld [vmem:[#allocation7 + $0xd0] sm:$0xff]
    %v114 = vld [vmem:[#allocation7 + $0xd8] sm:$0xff]
    %v115 = vld [vmem:[#allocation7 + $0xe0] sm:$0xff]
    %v116 = vld [vmem:[#allocation7 + $0xe8] sm:$0xff]
    %v117 = vld [vmem:[#allocation7 + $0xf0] sm:$0xff]
    %v118 = vld [vmem:[#allocation7 + $0xf8] sm:$0xff]
    %v119 = vld [vmem:[#allocation7 + $0x100] sm:$0xff]
    %v120 = vld [vmem:[#allocation7 + $0x108] sm:$0xff]
    %v121 = vld [vmem:[#allocation7 + $0x110] sm:$0xff]
    %v122 = vld [vmem:[#allocation7 + $0x118] sm:$0xff]
    %v123 = vld [vmem:[#allocation7 + $0x120] sm:$0xff]
    %v124 = vld [vmem:[#allocation7 + $0x128] sm:$0xff]
    %v125 = vld [vmem:[#allocation7 + $0x130] sm:$0xff]
    %v126 = vld [vmem:[#allocation7 + $0x138] sm:$0xff]
    %v127 = vld [vmem:[#allocation7 + $0x140] sm:$0xff]
    %v128 = vld [vmem:[#allocation7 + $0x148] sm:$0xff]
    %v129 = vld [vmem:[#allocation7 + $0x150] sm:$0xff]
    %v130 = vld [vmem:[#allocation7 + $0x158] sm:$0xff]
    %v131 = vld [vmem:[#allocation7 + $0x160] sm:$0xff]
    %v132 = vld [vmem:[#allocation7 + $0x168] sm:$0xff]
    %v133 = vld [vmem:[#allocation7 + $0x170] sm:$0xff]
    %v134 = vld [vmem:[#allocation7 + $0x178] sm:$0xff]
    %v135 = vld [vmem:[#allocation7 + $0x180] sm:$0xff]
    %v136 = vld [vmem:[#allocation7 + $0x188] sm:$0xff]
    %v137 = vld [vmem:[#allocation7 + $0x190] sm:$0xff]
    %v138 = vld [vmem:[#allocation7 + $0x198] sm:$0xff]
    %v139 = vld [vmem:[#allocation7 + $0x1a0] sm:$0xff]
    %v140 = vld [vmem:[#allocation7 + $0x1a8] sm:$0xff]
    %v141 = vld [vmem:[#allocation7 + $0x1b0] sm:$0xff]
    %v142 = vld [vmem:[#allocation7 + $0x1b8] sm:$0xff]
    %v143 = vld [vmem:[#allocation7 + $0x1c0] sm:$0xff]
    %v144 = vld [vmem:[#allocation7 + $0x1c8] sm:$0xff]
    %v145 = vld [vmem:[#allocation7 + $0x1d0] sm:$0xff]
    %v146 = vld [vmem:[#allocation7 + $0x1d8] sm:$0xff]
    %v147 = vld [vmem:[#allocation7 + $0x1e0] sm:$0xff]
    %v148 = vld [vmem:[#allocation7 + $0x1e8] sm:$0xff]
    %v149 = vld [vmem:[#allocation7 + $0x1f0] sm:$0xff]
    %v150 = vld [vmem:[#allocation7 + $0x1f8] sm:$0xff]
    %v151 = vld [vmem:[#allocation7 + $0x200] sm:$0xff]
    %v152 = vld [vmem:[#allocation7 + $0x208] sm:$0xff]
    %v153 = vld [vmem:[#allocation7 + $0x210] sm:$0xff]
    %v154 = vld [vmem:[#allocation7 + $0x218] sm:$0xff]
    %v155 = vld [vmem:[#allocation7 + $0x220] sm:$0xff]
    %v156 = vld [vmem:[#allocation7 + $0x228] sm:$0xff]
    %v157 = vld [vmem:[#allocation7 + $0x230] sm:$0xff]
    %v158 = vld [vmem:[#allocation7 + $0x238] sm:$0xff]
    %v159 = vld [vmem:[#allocation7 + $0x240] sm:$0xff]
    %v160 = vld [vmem:[#allocation7 + $0x248] sm:$0xff]
    %v161 = vld [vmem:[#allocation7 + $0x250] sm:$0xff]
    %v162 = vld [vmem:[#allocation7 + $0x258] sm:$0xff]
    %v163 = vld [vmem:[#allocation7 + $0x260] sm:$0xff]
    %v164 = vld [vmem:[#allocation7 + $0x268] sm:$0xff]
    %v165 = vld [vmem:[#allocation7 + $0x270] sm:$0xff]
    %v166 = vld [vmem:[#allocation7 + $0x278] sm:$0xff]
    %v167 = vld [vmem:[%s3] sm:$0x1]
    %v169 = vlaneseq
    %v170 = vshrl.u32 %v169, 7
    %v171 = vsub.s32 0, %v170
    %v172 = vrot.slane %v167, %v171
    %174 = vmatprep.subr.mxu0 0.0
    %175 = vmatpush1.msra.mxu0 %v87
    %176 = vmatprep.subr.mxu0 0.0
    %177 = vmatpush1.msra.mxu0 %v88
    %178 = vmatprep.subr.mxu0 0.0
    %179 = vmatpush1.msra.mxu0 %v89
    %180 = vmatprep.subr.mxu0 0.0
    %181 = vmatpush1.msra.mxu0 %v90
    %182 = vmatprep.subr.mxu0 0.0
    %183 = vmatpush1.msra.mxu0 %v91
    %184 = vmatprep.subr.mxu0 0.0
    %185 = vmatpush1.msra.mxu0 %v92
    %186 = vmatprep.subr.mxu0 0.0
    %187 = vmatpush1.msra.mxu0 %v93
    %188 = vmatprep.subr.mxu0 0.0
    %189 = vmatpush1.msra.mxu0 %v94
    %190 = vmatprep.subr.mxu0 0.0
    %191 = vmatpush1.msra.mxu0 %v95
    %192 = vmatprep.subr.mxu0 0.0
    %193 = vmatpush1.msra.mxu0 %v96
    %194 = vmatprep.subr.mxu0 0.0
    %195 = vmatpush1.msra.mxu0 %v97
    %196 = vmatprep.subr.mxu0 0.0
    %197 = vmatpush1.msra.mxu0 %v98
    %198 = vmatprep.subr.mxu0 0.0
    %199 = vmatpush1.msra.mxu0 %v99
    %200 = vmatprep.subr.mxu0 0.0
    %201 = vmatpush1.msra.mxu0 %v100
    %202 = vmatprep.subr.mxu0 0.0
    %203 = vmatpush1.msra.mxu0 %v101
    %204 = vmatprep.subr.mxu0 0.0
    %205 = vmatpush1.msra.mxu0 %v102
    %206 = vmatprep.subr.mxu0 0.0
    %207 = vmatpush1.msra.mxu0 %v103
    %208 = vmatprep.subr.mxu0 0.0
    %209 = vmatpush1.msra.mxu0 %v104
    %210 = vmatprep.subr.mxu0 0.0
    %211 = vmatpush1.msra.mxu0 %v105
    %212 = vmatprep.subr.mxu0 0.0
    %213 = vmatpush1.msra.mxu0 %v106
    %214 = vmatprep.subr.mxu0 0.0
    %215 = vmatpush1.msra.mxu0 %v107
    %216 = vmatprep.subr.mxu0 0.0
    %217 = vmatpush1.msra.mxu0 %v108
    %218 = vmatprep.subr.mxu0 0.0
    %219 = vmatpush1.msra.mxu0 %v109
    %220 = vmatprep.subr.mxu0 0.0
    %221 = vmatpush1.msra.mxu0 %v110
    %222 = vmatprep.subr.mxu0 0.0
    %223 = vmatpush1.msra.mxu0 %v111
    %224 = vmatprep.subr.mxu0 0.0
    %225 = vmatpush1.msra.mxu0 %v112
    %226 = vmatprep.subr.mxu0 0.0
    %227 = vmatpush1.msra.mxu0 %v113
    %228 = vmatprep.subr.mxu0 0.0
    %229 = vmatpush1.msra.mxu0 %v114
    %230 = vmatprep.subr.mxu0 0.0
    %231 = vmatpush1.msra.mxu0 %v115
    %232 = vmatprep.subr.mxu0 0.0
    %233 = vmatpush1.msra.mxu0 %v116
    %234 = vmatprep.subr.mxu0 0.0
    %235 = vmatpush1.msra.mxu0 %v117
    %236 = vmatprep.subr.mxu0 0.0
    %237 = vmatpush1.msra.mxu0 %v118
    %238 = vmatprep.mubr.f32.mxu0 %v83
    %239 = vmatmul.mubr.f32.gmra.mrb[0].mxu0 %v82
    %v240 = vpop.f32.mrb[0].mxu0
    %v241 = vadd.f32 %v172, %v240
    %v242 = vpop.f32.mrb[0].mxu0
    %243 = vdwg.mxu0
    %244 = vmatprep.subr.mxu0 0.0
    %245 = vmatpush1.msra.mxu0 %v119
    %246 = vmatprep.subr.mxu0 0.0
    %247 = vmatpush1.msra.mxu0 %v120
    %248 = vmatprep.subr.mxu0 0.0
    %249 = vmatpush1.msra.mxu0 %v121
    %250 = vmatprep.subr.mxu0 0.0
    %251 = vmatpush1.msra.mxu0 %v122
    %252 = vmatprep.subr.mxu0 0.0
    %253 = vmatpush1.msra.mxu0 %v123
    %254 = vmatprep.subr.mxu0 0.0
    %255 = vmatpush1.msra.mxu0 %v124
    %256 = vmatprep.subr.mxu0 0.0
    %257 = vmatpush1.msra.mxu0 %v125
    %258 = vmatprep.subr.mxu0 0.0
    %259 = vmatpush1.msra.mxu0 %v126
    %260 = vmatprep.subr.mxu0 0.0
    %261 = vmatpush1.msra.mxu0 %v127
    %262 = vmatprep.subr.mxu0 0.0
    %263 = vmatpush1.msra.mxu0 %v128
    %264 = vmatprep.subr.mxu0 0.0
    %265 = vmatpush1.msra.mxu0 %v129
    %266 = vmatprep.subr.mxu0 0.0
    %267 = vmatpush1.msra.mxu0 %v130
    %268 = vmatprep.subr.mxu0 0.0
    %269 = vmatpush1.msra.mxu0 %v131
    %270 = vmatprep.subr.mxu0 0.0
    %271 = vmatpush1.msra.mxu0 %v132
    %272 = vmatprep.subr.mxu0 0.0
    %273 = vmatpush1.msra.mxu0 %v133
    %274 = vmatprep.subr.mxu0 0.0
    %275 = vmatpush1.msra.mxu0 %v134
    %276 = vmatprep.subr.mxu0 0.0
    %277 = vmatpush1.msra.mxu0 %v135
    %278 = vmatprep.subr.mxu0 0.0
    %279 = vmatpush1.msra.mxu0 %v136
    %280 = vmatprep.subr.mxu0 0.0
    %281 = vmatpush1.msra.mxu0 %v137
    %282 = vmatprep.subr.mxu0 0.0
    %283 = vmatpush1.msra.mxu0 %v138
    %284 = vmatprep.subr.mxu0 0.0
    %285 = vmatpush1.msra.mxu0 %v139
    %286 = vmatprep.subr.mxu0 0.0
    %287 = vmatpush1.msra.mxu0 %v140
    %288 = vmatprep.subr.mxu0 0.0
    %289 = vmatpush1.msra.mxu0 %v141
    %290 = vmatprep.subr.mxu0 0.0
    %291 = vmatpush1.msra.mxu0 %v142
    %292 = vmatprep.subr.mxu0 0.0
    %293 = vmatpush1.msra.mxu0 %v143
    %294 = vmatprep.subr.mxu0 0.0
    %295 = vmatpush1.msra.mxu0 %v144
    %296 = vmatprep.subr.mxu0 0.0
    %297 = vmatpush1.msra.mxu0 %v145
    %298 = vmatprep.subr.mxu0 0.0
    %299 = vmatpush1.msra.mxu0 %v146
    %300 = vmatprep.subr.mxu0 0.0
    %301 = vmatpush1.msra.mxu0 %v147
    %302 = vmatprep.subr.mxu0 0.0
    %303 = vmatpush1.msra.mxu0 %v148
    %304 = vmatprep.subr.mxu0 0.0
    %305 = vmatpush1.msra.mxu0 %v149
    %306 = vmatprep.subr.mxu0 0.0
    %307 = vmatpush1.msra.mxu0 %v150
    %308 = vmatprep.mubr.f32.mxu0 %v85
    %309 = vmatmul.mubr.f32.gmra.mrb[0].mxu0 %v84
    %v310 = vpop.f32.mrb[0].mxu0
    %v311 = vadd.f32 %v241, %v310
    %v312 = vpop.f32.mrb[0].mxu0
    %313 = vdwg.mxu0
    %314 = vmatprep.subr.mxu0 0.0
    %315 = vmatpush1.msra.mxu0 %v151
    %316 = vmatprep.subr.mxu0 0.0
    %317 = vmatpush1.msra.mxu0 %v152
    %318 = vmatprep.subr.mxu0 0.0
    %319 = vmatpush1.msra.mxu0 %v153
    %320 = vmatprep.subr.mxu0 0.0
    %321 = vmatpush1.msra.mxu0 %v154
    %322 = vmatprep.subr.mxu0 0.0
    %323 = vmatpush1.msra.mxu0 %v155
    %324 = vmatprep.subr.mxu0 0.0
    %325 = vmatpush1.msra.mxu0 %v156
    %326 = vmatprep.subr.mxu0 0.0
    %327 = vmatpush1.msra.mxu0 %v157
    %328 = vmatprep.subr.mxu0 0.0
    %329 = vmatpush1.msra.mxu0 %v158
    %330 = vmatprep.subr.mxu0 0.0
    %331 = vmatpush1.msra.mxu0 %v159
    %332 = vmatprep.subr.mxu0 0.0
    %333 = vmatpush1.msra.mxu0 %v160
    %334 = vmatprep.subr.mxu0 0.0
    %335 = vmatpush1.msra.mxu0 %v161
    %336 = vmatprep.subr.mxu0 0.0
    %337 = vmatpush1.msra.mxu0 %v162
    %338 = vmatprep.subr.mxu0 0.0
    %339 = vmatpush1.msra.mxu0 %v163
    %340 = vmatprep.subr.mxu0 0.0
    %341 = vmatpush1.msra.mxu0 %v164
    %342 = vmatprep.subr.mxu0 0.0
    %343 = vmatpush1.msra.mxu0 %v165
    %344 = vmatprep.subr.mxu0 0.0
    %345 = vmatpush1.msra.mxu0 %v166
    %346 = vmatprep.subr.mxu0 0.0
    %347 = vmatpush1.msra.mxu0 0.0
    %348 = vmatprep.subr.mxu0 0.0
    %349 = vmatpush1.msra.mxu0 0.0
    %350 = vmatprep.subr.mxu0 0.0
    %351 = vmatpush1.msra.mxu0 0.0
    %352 = vmatprep.subr.mxu0 0.0
    %353 = vmatpush1.msra.mxu0 0.0
    %354 = vmatprep.subr.mxu0 0.0
    %355 = vmatpush1.msra.mxu0 0.0
    %356 = vmatprep.subr.mxu0 0.0
    %357 = vmatpush1.msra.mxu0 0.0
    %358 = vmatprep.subr.mxu0 0.0
    %359 = vmatpush1.msra.mxu0 0.0
    %360 = vmatprep.subr.mxu0 0.0
    %361 = vmatpush1.msra.mxu0 0.0
    %362 = vmatprep.subr.mxu0 0.0
    %363 = vmatpush1.msra.mxu0 0.0
    %364 = vmatprep.subr.mxu0 0.0
    %365 = vmatpush1.msra.mxu0 0.0
    %366 = vmatprep.subr.mxu0 0.0
    %367 = vmatpush1.msra.mxu0 0.0
    %368 = vmatprep.subr.mxu0 0.0
    %369 = vmatpush1.msra.mxu0 0.0
    %370 = vmatprep.subr.mxu0 0.0
    %371 = vmatpush1.msra.mxu0 0.0
    %372 = vmatprep.subr.mxu0 0.0
    %373 = vmatpush1.msra.mxu0 0.0
    %374 = vmatprep.subr.mxu0 0.0
    %375 = vmatpush1.msra.mxu0 0.0
    %376 = vmatprep.subr.mxu0 0.0
    %377 = vmatpush1.msra.mxu0 0.0
    %378 = vmatprep.mubr.f32.mxu0 0.0
    %379 = vmatmul.mubr.f32.gmra.mrb[0].mxu0 %v86
    %v380 = vpop.f32.mrb[0].mxu0
    %v381 = vadd.f32 %v311, %v380
    %v382 = vpop.f32.mrb[0].mxu0
    %383 = vdwg.mxu0
    %v384 = vmax.f32 %v381, 0.0
    %s385 = smul.u32 0, 8
    %s386 = sld [smem:[#allocation3]]
    %v387 = vlaneseq
    %v388 = vshrl.u32 %v387, 7
    %v389 = vstv %s385
    %v390 = vadd.s32 %v388, %v389
    %v391 = vlaneseq
    %v392 = vand.u32 %v391, 127
    %s393 = smul.u32 %s386, 2654435769
    %v394 = vmul.u32 %v390, 2246822507
    %v395 = vstv %s393
    %v396 = vadd.s32 %v395, %v394
    %v397 = vmul.u32 %v392, 3266489909
    %v398 = vadd.s32 %v396, %v397
    %v399 = vshra.s32 %v398, 16
    %v400 = vand.u32 %v399, 65535
    %v401 = vxor.u32 %v398, %v400
    %v402 = vmul.u32 %v401, 2246822507
    %v403 = vshra.s32 %v402, 13
    %v404 = vand.u32 %v403, 524287
    %v405 = vxor.u32 %v402, %v404
    %v406 = vmul.u32 %v405, 3266489909
    %v407 = vshra.s32 %v406, 16
    %v408 = vand.u32 %v407, 65535
    %v409 = vxor.u32 %v406, %v408
    %vm410 = vcmp.ge.s32.totalorder %v409, 0
    %v411 = vsel %vm410, %v384, 0.0
    %v412 = vld [vmem:[#allocation9] sm:$0xff]
    %v413 = vld [vmem:[#allocation9 + $0x8] sm:$0xff]
    %v414 = vld [vmem:[#allocation9 + $0x10] sm:$0xff]
    %v415 = vld [vmem:[#allocation9 + $0x18] sm:$0xff]
    %v416 = vld [vmem:[#allocation9 + $0x20] sm:$0xff]
    %v417 = vld [vmem:[#allocation9 + $0x28] sm:$0xff]
    %v418 = vld [vmem:[#allocation9 + $0x30] sm:$0xff]
    %v419 = vld [vmem:[#allocation9 + $0x38] sm:$0xff]
    %v420 = vld [vmem:[#allocation9 + $0x40] sm:$0xff]
    %v421 = vld [vmem:[#allocation9 + $0x48] sm:$0xff]
    %v422 = vld [vmem:[#allocation9 + $0x50] sm:$0xff]
    %v423 = vld [vmem:[#allocation9 + $0x58] sm:$0xff]
    %v424 = vld [vmem:[#allocation9 + $0x60] sm:$0xff]
    %v425 = vld [vmem:[#allocation9 + $0x68] sm:$0xff]
    %v426 = vld [vmem:[#allocation9 + $0x70] sm:$0xff]
    %v427 = vld [vmem:[#allocation9 + $0x78] sm:$0xff]
    %v428 = vld [vmem:[%s5] sm:$0x1]
    %v430 = vlaneseq
    %v431 = vshrl.u32 %v430, 7
    %v432 = vsub.s32 0, %v431
    %v433 = vrot.slane %v428, %v432
    %435 = vmatprep.subr.mxu0 0.0
    %436 = vmatpush1.msra.mxu0 %v412
    %437 = vmatprep.subr.mxu0 0.0
    %438 = vmatpush1.msra.mxu0 %v413
    %439 = vmatprep.subr.mxu0 0.0
    %440 = vmatpush1.msra.mxu0 %v414
    %441 = vmatprep.subr.mxu0 0.0
    %442 = vmatpush1.msra.mxu0 %v415
    %443 = vmatprep.subr.mxu0 0.0
    %444 = vmatpush1.msra.mxu0 %v416
    %445 = vmatprep.subr.mxu0 0.0
    %446 = vmatpush1.msra.mxu0 %v417
    %447 = vmatprep.subr.mxu0 0.0
    %448 = vmatpush1.msra.mxu0 %v418
    %449 = vmatprep.subr.mxu0 0.0
    %450 = vmatpush1.msra.mxu0 %v419
    %451 = vmatprep.subr.mxu0 0.0
    %452 = vmatpush1.msra.mxu0 %v420
    %453 = vmatprep.subr.mxu0 0.0
    %454 = vmatpush1.msra.mxu0 %v421
    %455 = vmatprep.subr.mxu0 0.0
    %456 = vmatpush1.msra.mxu0 %v422
    %457 = vmatprep.subr.mxu0 0.0
    %458 = vmatpush1.msra.mxu0 %v423
    %459 = vmatprep.subr.mxu0 0.0
    %460 = vmatpush1.msra.mxu0 %v424
    %461 = vmatprep.subr.mxu0 0.0
    %462 = vmatpush1.msra.mxu0 %v425
    %463 = vmatprep.subr.mxu0 0.0
    %464 = vmatpush1.msra.mxu0 %v426
    %465 = vmatprep.subr.mxu0 0.0
    %466 = vmatpush1.msra.mxu0 %v427
    %467 = vmatprep.subr.mxu0 0.0
    %468 = vmatpush1.msra.mxu0 0.0
    %469 = vmatprep.subr.mxu0 0.0
    %470 = vmatpush1.msra.mxu0 0.0
    %471 = vmatprep.subr.mxu0 0.0
    %472 = vmatpush1.msra.mxu0 0.0
    %473 = vmatprep.subr.mxu0 0.0
    %474 = vmatpush1.msra.mxu0 0.0
    %475 = vmatprep.subr.mxu0 0.0
    %476 = vmatpush1.msra.mxu0 0.0
    %477 = vmatprep.subr.mxu0 0.0
    %478 = vmatpush1.msra.mxu0 0.0
    %479 = vmatprep.subr.mxu0 0.0
    %480 = vmatpush1.msra.mxu0 0.0
    %481 = vmatprep.subr.mxu0 0.0
    %482 = vmatpush1.msra.mxu0 0.0
    %483 = vmatprep.subr.mxu0 0.0
    %484 = vmatpush1.msra.mxu0 0.0
    %485 = vmatprep.subr.mxu0 0.0
    %486 = vmatpush1.msra.mxu0 0.0
    %487 = vmatprep.subr.mxu0 0.0
    %488 = vmatpush1.msra.mxu0 0.0
    %489 = vmatprep.subr.mxu0 0.0
    %490 = vmatpush1.msra.mxu0 0.0
    %491 = vmatprep.subr.mxu0 0.0
    %492 = vmatpush1.msra.mxu0 0.0
    %493 = vmatprep.subr.mxu0 0.0
    %494 = vmatpush1.msra.mxu0 0.0
    %495 = vmatprep.subr.mxu0 0.0
    %496 = vmatpush1.msra.mxu0 0.0
    %497 = vmatprep.subr.mxu0 0.0
    %498 = vmatpush1.msra.mxu0 0.0
    %499 = vmatprep.mubr.f32.mxu0 0.0
    %500 = vmatmul.mubr.f32.gmra.mrb[0].mxu0 %v411
    %v501 = vpop.f32.mrb[0].mxu0
    %v502 = vadd.f32 %v433, %v501
    %v503 = vpop.f32.mrb[0].mxu0
    %504 = vdwg.mxu0
    %v505 = vmax.f32 %v502, 0.0
    %v506 = vld [vmem:[#allocation10] sm:$0xff]
    %v507 = vld [vmem:[#allocation10 + $0x8] sm:$0xff]
    %v508 = vld [vmem:[#allocation10 + $0x10] sm:$0xff]
    %v509 = vld [vmem:[#allocation10 + $0x18] sm:$0xff]
    %v510 = vld [vmem:[#allocation10 + $0x20] sm:$0xff]
    %v511 = vld [vmem:[#allocation10 + $0x28] sm:$0xff]
    %v512 = vld [vmem:[#allocation10 + $0x30] sm:$0xff]
    %v513 = vld [vmem:[#allocation10 + $0x38] sm:$0xff]
    %v514 = vld [vmem:[#allocation10 + $0x40] sm:$0xff]
    %v515 = vld [vmem:[#allocation10 + $0x48] sm:$0xff]
    %v516 = vld [vmem:[#allocation10 + $0x50] sm:$0xff]
    %v517 = vld [vmem:[#allocation10 + $0x58] sm:$0xff]
    %v518 = vld [vmem:[#allocation10 + $0x60] sm:$0xff]
    %v519 = vld [vmem:[#allocation10 + $0x68] sm:$0xff]
    %v520 = vld [vmem:[#allocation10 + $0x70] sm:$0xff]
    %v521 = vld [vmem:[#allocation10 + $0x78] sm:$0xff]
    %v522 = vld [vmem:[%s7] sm:$0x1]
    %v524 = vlaneseq
    %v525 = vshrl.u32 %v524, 7
    %v526 = vsub.s32 0, %v525
    %v527 = vrot.slane %v522, %v526
    %529 = vmatprep.subr.mxu0 0.0
    %530 = vmatpush1.msra.mxu0 %v506
    %531 = vmatprep.subr.mxu0 0.0
    %532 = vmatpush1.msra.mxu0 %v507
    %533 = vmatprep.subr.mxu0 0.0
    %534 = vmatpush1.msra.mxu0 %v508
    %535 = vmatprep.subr.mxu0 0.0
    %536 = vmatpush1.msra.mxu0 %v509
    %537 = vmatprep.subr.mxu0 0.0
    %538 = vmatpush1.msra.mxu0 %v510
    %539 = vmatprep.subr.mxu0 0.0
    %540 = vmatpush1.msra.mxu0 %v511
    %541 = vmatprep.subr.mxu0 0.0
    %542 = vmatpush1.msra.mxu0 %v512
    %543 = vmatprep.subr.mxu0 0.0
    %544 = vmatpush1.msra.mxu0 %v513
    %545 = vmatprep.subr.mxu0 0.0
    %546 = vmatpush1.msra.mxu0 %v514
    %547 = vmatprep.subr.mxu0 0.0
    %548 = vmatpush1.msra.mxu0 %v515
    %549 = vmatprep.subr.mxu0 0.0
    %550 = vmatpush1.msra.mxu0 %v516
    %551 = vmatprep.subr.mxu0 0.0
    %552 = vmatpush1.msra.mxu0 %v517
    %553 = vmatprep.subr.mxu0 0.0
    %554 = vmatpush1.msra.mxu0 %v518
    %555 = vmatprep.subr.mxu0 0.0
    %556 = vmatpush1.msra.mxu0 %v519
    %557 = vmatprep.subr.mxu0 0.0
    %558 = vmatpush1.msra.mxu0 %v520
    %559 = vmatprep.subr.mxu0 0.0
    %560 = vmatpush1.msra.mxu0 %v521
    %561 = vmatprep.subr.mxu0 0.0
    %562 = vmatpush1.msra.mxu0 0.0
    %563 = vmatprep.subr.mxu0 0.0
    %564 = vmatpush1.msra.mxu0 0.0
    %565 = vmatprep.subr.mxu0 0.0
    %566 = vmatpush1.msra.mxu0 0.0
    %567 = vmatprep.subr.mxu0 0.0
    %568 = vmatpush1.msra.mxu0 0.0
    %569 = vmatprep.subr.mxu0 0.0
    %570 = vmatpush1.msra.mxu0 0.0
    %571 = vmatprep.subr.mxu0 0.0
    %572 = vmatpush1.msra.mxu0 0.0
    %573 = vmatprep.subr.mxu0 0.0
    %574 = vmatpush1.msra.mxu0 0.0
    %575 = vmatprep.subr.mxu0 0.0
    %576 = vmatpush1.msra.mxu0 0.0
    %577 = vmatprep.subr.mxu0 0.0
    %578 = vmatpush1.msra.mxu0 0.0
    %579 = vmatprep.subr.mxu0 0.0
    %580 = vmatpush1.msra.mxu0 0.0
    %581 = vmatprep.subr.mxu0 0.0
    %582 = vmatpush1.msra.mxu0 0.0
    %583 = vmatprep.subr.mxu0 0.0
    %584 = vmatpush1.msra.mxu0 0.0
    %585 = vmatprep.subr.mxu0 0.0
    %586 = vmatpush1.msra.mxu0 0.0
    %587 = vmatprep.subr.mxu0 0.0
    %588 = vmatpush1.msra.mxu0 0.0
    %589 = vmatprep.subr.mxu0 0.0
    %590 = vmatpush1.msra.mxu0 0.0
    %591 = vmatprep.subr.mxu0 0.0
    %592 = vmatpush1.msra.mxu0 0.0
    %593 = vmatprep.mubr.f32.mxu0 0.0
    %594 = vmatmul.mubr.f32.gmra.mrb[0].mxu0 %v505
    %v595 = vpop.f32.mrb[0].mxu0
    %v596 = vadd.f32 %v527, %v595
    %v597 = vpop.f32.mrb[0].mxu0
    %598 = vdwg.mxu0
    %599 = vst [vmem:[#allocation12] sm:$0xff] %v596
    // Predicated region
    $region46: #{_classifier_pallas.1} parent=1 // pred_check
      _
    $region47: #{_classifier_pallas.1} parent=1 // pred_check_branch
      %601 = sbr.rel (0) target = $region49
    $region48: #{_classifier_pallas.1} parent=1 // pred_region
      %s603 = ssub.s32 128, 128
      %604 = vsyncadd [#allocation6], %s603
      %s606 = sshll.u32 [#allocation12], 4
      %s607 = int_to_ptr.vmem [resolvable:$true] %s606
      %609 = dma.vmem_to_hbm [thread:$0]  %s607, 128, %s8, [#allocation6]
    $region49: #{_classifier_pallas.1} parent=1 // pred_fallthru
      _
    // Predicated region
    $region50: #{_classifier_pallas.1} parent=1 // pred_check
      _
    $region51: #{_classifier_pallas.1} parent=1 // pred_check_branch
      %611 = sbr.rel (0) target = $region53
    $region52: #{_classifier_pallas.1} parent=1 // pred_region
      %612 = dma.done [#allocation6], 128
    $region53: #{_classifier_pallas.1} parent=1 // pred_fallthru
      _
    %613 = vsyncpa [#allocation5], 1
    %614 = vsyncpa [#allocation8], 1
    %615 = vsyncpa [#allocation11], 1
    %616 = vsyncpa [#allocation6], 1

</llo_original>
